<compile_context>
chip_gen: v6e
topology: v6e:2x2x1
jax: 0.10.0
libtpu: 0.0.40
codegen_flags: <defaults>
</compile_context>

<pallas_src>
import jax
import jax.numpy as jnp
from jax import lax
from jax.experimental import pallas as pl
from jax.experimental.pallas import tpu as pltpu

_BN_EPS = 1e-5
_TM_CAP = 32768          # max lane-tile width (amortizes ~0.35us/step overhead)


def _vmem_config():
    """Generation-aware (tile_budget, scoped_vmem_limit) in bytes."""
    try:
        phys = int(getattr(pltpu.get_tpu_info(), "vmem_capacity_bytes", 64 << 20))
    except Exception:  # off-device / API drift: fall back to v7x-safe numbers
        phys = 64 << 20
    if phys >= (100 << 20):          # v5e / v6e class parts (128 MiB physical)
        return 48 << 20, 96 << 20
    return 20 << 20, 32 << 20        # v7x class parts (64 MiB per TensorCore)


def _pick_tile(P, bytes_per_lane, fixed_bytes, budget):
    """Largest lane tile (multiple of 128, <= cap) fitting the VMEM budget,
    preferring a tile that divides P so no tail masking is needed."""
    avail = max(budget - fixed_bytes, 1 << 20)
    tm = avail // max(bytes_per_lane, 1)
    tm = int(max(128, min(tm // 128 * 128, _TM_CAP)))
    if P <= tm:
        return int(P)                 # single full-extent tile (== array dim)
    for cand in range(tm, 127, -128):  # prefer TM | P  -> no tail mask
        if P % cand == 0:
            return cand
    return tm


def _conv_kernel(x_ref, w_ref, b_ref, o_ref):
    # x: (1, Cin, TM)  w: (Cout, Cin)  b: (Cout, 1)  o: (1, Cout, TM)
    y = jnp.dot(w_ref[...], x_ref[0], preferred_element_type=jnp.float32)
    o_ref[0] = (y + b_ref[...]).astype(o_ref.dtype)


def _make_stats_kernel(P, TM):
    needs_mask = (P % TM) != 0        # static; only when no divisor tile exists
    dn = (((1,), (1,)), ((), ()))     # contract the lane axis of both operands

    def _stats_kernel(x_ref, s_ref, sx_ref):
        i = pl.program_id(1)

        @pl.when(i == 0)              # new image -> reset per-image accumulators
        def _():
            s_ref[...] = jnp.zeros_like(s_ref)
            sx_ref[...] = jnp.zeros_like(sx_ref)

        x = x_ref[0]                                           # (Cin, TM)
        if needs_mask:
            # select (not multiply): keeps NaN/garbage in the OOB tail harmless
            col = i * TM + lax.broadcasted_iota(jnp.int32, x.shape, 1)
            x = jnp.where(col < P, x, jnp.zeros_like(x))
        ones = jnp.ones((1, x.shape[1]), x.dtype)
        # Gram accumulation entirely on the MXU (no XLU cross-lane reduce).
        s_ref[0] += lax.dot_general(x, x, dn, preferred_element_type=jnp.float32)
        sx_ref[0] += lax.dot_general(x, ones, dn, preferred_element_type=jnp.float32)

    return _stats_kernel


def single_conv_block(x_nchw, weight, bias, gamma, beta, *, stride, use_bn=True):
    """Forward of SingleConvBlock.

    x_nchw : (N, Cin, H, W)
    weight : (Cout, Cin, 1, 1) conv weight
    bias   : (Cout,) conv bias
    gamma  : (Cout,) BN weight
    beta   : (Cout,) BN bias
    """
    N, Cin, H, W = x_nchw.shape
    Cout = weight.shape[0]

    # TODO(synk): strided gather should move into the kernel DMA (see header).
    xs = x_nchw[:, :, ::stride, ::stride] if stride > 1 else x_nchw
    Ho, Wo = xs.shape[2], xs.shape[3]
    P = Ho * Wo
    M = N * P

    cdtype = jnp.bfloat16 if x_nchw.dtype == jnp.bfloat16 else jnp.float32
    x3 = xs.reshape(N, Cin, P)                   # free reshape (no transpose)
    if x3.dtype != cdtype:
        x3 = x3.astype(cdtype)
    in_bytes = jnp.dtype(cdtype).itemsize

    w2 = weight.reshape(Cout, Cin).astype(jnp.float32)
    b2 = bias.reshape(Cout, 1).astype(jnp.float32)

    tile_budget, vmem_limit = _vmem_config()

    if use_bn:
        # ---------------- pass 1: per-image Gram statistics ----------------
        tm_s = _pick_tile(P, 2 * Cin * in_bytes,
                          2 * (Cin * Cin + Cin) * 4 + 4096, tile_budget)
        s_n, sx_n = pl.pallas_call(
            _make_stats_kernel(P, tm_s),
            out_shape=(jax.ShapeDtypeStruct((N, Cin, Cin), jnp.float32),
                       jax.ShapeDtypeStruct((N, Cin, 1), jnp.float32)),
            grid=(N, pl.cdiv(P, tm_s)),
            in_specs=[pl.BlockSpec((1, Cin, tm_s), lambda n, i: (n, 0, i))],
            out_specs=(pl.BlockSpec((1, Cin, Cin), lambda n, i: (n, 0, 0)),
                       pl.BlockSpec((1, Cin, 1), lambda n, i: (n, 0, 0))),
            compiler_params=pltpu.CompilerParams(
                dimension_semantics=("parallel", "arbitrary"),
                vmem_limit_bytes=vmem_limit),
            cost_estimate=pl.CostEstimate(
                flops=2 * M * Cin * (Cin + 1),
                transcendentals=0,
                bytes_accessed=in_bytes * M * Cin + 4 * N * (Cin * Cin + Cin)),
        )(x3)

        # ------- tiny wrapper math: derive BN stats and fold into conv -------
        S = jnp.sum(s_n, axis=0)                       # (Cin, Cin)
        sx = jnp.sum(sx_n, axis=0)                     # (Cin, 1)
        wsx = w2 @ sx                                  # (Cout, 1)
        sum_y = wsx + M * b2
        sumsq_y = (jnp.sum((w2 @ S) * w2, axis=1, keepdims=True)
                   + 2.0 * b2 * wsx + M * b2 * b2)
        mean = sum_y / M
        var = jnp.maximum(sumsq_y / M - mean * mean, 0.0)
        inv = lax.rsqrt(var + _BN_EPS)
        scale = gamma.reshape(Cout, 1).astype(jnp.float32) * inv
        shift = beta.reshape(Cout, 1).astype(jnp.float32) - mean * scale
        w_eff = w2 * scale
        b_eff = b2 * scale + shift
    else:
        w_eff, b_eff = w2, b2

    w_pass = w_eff if cdtype == jnp.float32 else w_eff.astype(cdtype)

    # -------- pass 2: streaming 1x1 conv with (optionally folded) weights ----
    tm_c = _pick_tile(P, 2 * (Cin + Cout) * in_bytes,
                      2 * (Cout * Cin + Cout) * 4 + 4096, tile_budget)
    out3 = pl.pallas_call(
        _conv_kernel,
        out_shape=jax.ShapeDtypeStruct((N, Cout, P), cdtype),
        grid=(N, pl.cdiv(P, tm_c)),
        in_specs=[pl.BlockSpec((1, Cin, tm_c), lambda n, i: (n, 0, i)),
                  pl.BlockSpec((Cout, Cin), lambda n, i: (0, 0)),
                  pl.BlockSpec((Cout, 1), lambda n, i: (0, 0))],
        out_specs=pl.BlockSpec((1, Cout, tm_c), lambda n, i: (n, 0, i)),
        compiler_params=pltpu.CompilerParams(
            dimension_semantics=("parallel", "parallel"),
            vmem_limit_bytes=vmem_limit),
        cost_estimate=pl.CostEstimate(
            flops=2 * M * Cin * Cout,
            transcendentals=0,
            bytes_accessed=in_bytes * M * (Cin + Cout)
                           + 4 * (Cout * Cin + Cout)),
    )(x3, w_pass, b_eff)

    return out3.reshape(N, Cout, Ho, Wo)


def _reference(x_nchw, weight, bias, gamma, beta, *, stride, use_bn=True):
    """Pure-JAX reference for correctness checking."""
    xs = x_nchw[:, :, ::stride, ::stride]
    w2 = weight.reshape(weight.shape[0], weight.shape[1])
    y = jnp.einsum("nchw,oc->nohw", xs, w2) + bias[None, :, None, None]
    if use_bn:
        mean = jnp.mean(y, axis=(0, 2, 3), keepdims=True)
        var = jnp.mean((y - mean) ** 2, axis=(0, 2, 3), keepdims=True)
        y = (y - mean) / jnp.sqrt(var + _BN_EPS)
        y = y * gamma[None, :, None, None] + beta[None, :, None, None]
    return y


if __name__ == "__main__":
    # SingleConvBlock(in_features=4, out_features=8, stride=2, use_bs=True)
    N, Cin, H, W = 2, 4, 16, 16
    Cout = 8
    stride = 2

    key = jax.random.PRNGKey(0)
    kx, kw, kb, kg, kbe = jax.random.split(key, 5)

    x = jax.random.normal(kx, (N, Cin, H, W), dtype=jnp.float32)
    weight = jax.random.normal(kw, (Cout, Cin, 1, 1), dtype=jnp.float32) * 0.1
    bias = jax.random.normal(kb, (Cout,), dtype=jnp.float32) * 0.1
    gamma = 1.0 + 0.1 * jax.random.normal(kg, (Cout,), dtype=jnp.float32)
    beta = 0.1 * jax.random.normal(kbe, (Cout,), dtype=jnp.float32)

    # Conv + BN path (training-mode batch statistics).
    out = single_conv_block(x, weight, bias, gamma, beta, stride=stride, use_bn=True)
    out = jax.block_until_ready(out)
    ref = _reference(x, weight, bias, gamma, beta, stride=stride, use_bn=True)
    assert out.shape == (N, Cout, H // stride, W // stride), out.shape
    assert jnp.allclose(out, ref, atol=1e-4, rtol=1e-3), "BN path mismatch vs reference"

    # Conv-only path (use_bs=False).
    out2 = single_conv_block(x, weight, bias, gamma, beta, stride=stride, use_bn=False)
    out2 = jax.block_until_ready(out2)
    ref2 = _reference(x, weight, bias, gamma, beta, stride=stride, use_bn=False)
    assert jnp.allclose(out2, ref2, atol=1e-4, rtol=1e-3), "conv path mismatch vs reference"

    print("KERNEL_OK")
</pallas_src>

<mosaic_0001>
module attributes {stable_mosaic.version = 11 : i64} {
  func.func @_stats_kernel(%arg0: i32, %arg1: i32, %arg2: memref<1x4x64xf32, #tpu.memory_space<vmem>>, %arg3: memref<1x4x4xf32, #tpu.memory_space<vmem>>, %arg4: memref<1x4x1xf32, #tpu.memory_space<vmem>>) attributes {dimension_semantics = [#tpu.dimension_semantics<parallel>, #tpu.dimension_semantics<arbitrary>], iteration_bounds = array<i64: 2, 1>, scalar_prefetch = 0 : i64, scratch_operands = 0 : i64, tpu.core_type = #tpu.core_type<tc>, window_params = [{transform_indices = @transform_0, window_bounds = array<i64: 1, 4, 64>}, {transform_indices = @transform_1, window_bounds = array<i64: 1, 4, 4>}, {transform_indices = @transform_2, window_bounds = array<i64: 1, 4, 1>}]} {
    %c0_i32 = arith.constant 0 : i32
    %0 = arith.cmpi eq, %arg1, %c0_i32 : i32
    %1 = arith.extui %0 : i1 to i32
    %c0_i32_0 = arith.constant 0 : i32
    %2 = arith.cmpi ne, %1, %c0_i32_0 : i32
    scf.if %2 {
      %cst_17 = arith.constant 0.000000e+00 : f32
      %20 = vector.broadcast %cst_17 : f32 to vector<1x4x4xf32>
      %c0_18 = arith.constant 0 : index
      %c0_19 = arith.constant 0 : index
      %c0_20 = arith.constant 0 : index
      %21 = vector.load %arg3[%c0_18, %c0_19, %c0_20] : memref<1x4x4xf32, #tpu.memory_space<vmem>>, vector<1x4x4xf32>
      tpu.vector_store %arg3[%c0_18, %c0_19, %c0_20], %20 {strides = array<i32>} : memref<1x4x4xf32, #tpu.memory_space<vmem>>, vector<1x4x4xf32>,
      %cst_21 = arith.constant 0.000000e+00 : f32
      %22 = vector.broadcast %cst_21 : f32 to vector<1x4x1xf32>
      %c0_22 = arith.constant 0 : index
      %c0_23 = arith.constant 0 : index
      %c0_24 = arith.constant 0 : index
      %23 = vector.load %arg4[%c0_22, %c0_23, %c0_24] : memref<1x4x1xf32, #tpu.memory_space<vmem>>, vector<1x4x1xf32>
      tpu.vector_store %arg4[%c0_22, %c0_23, %c0_24], %22 {strides = array<i32>} : memref<1x4x1xf32, #tpu.memory_space<vmem>>, vector<1x4x1xf32>,
    } else {
    }
    %c0 = arith.constant 0 : index
    %c0_1 = arith.constant 0 : index
    %c0_2 = arith.constant 0 : index
    %3 = vector.load %arg2[%c0, %c0_1, %c0_2] : memref<1x4x64xf32, #tpu.memory_space<vmem>>, vector<1x4x64xf32>
    %4 = vector.shape_cast %3 : vector<1x4x64xf32> to vector<4x64xf32>
    %cst = arith.constant 1.000000e+00 : f32
    %5 = vector.broadcast %cst : f32 to vector<1x64xf32>
    %c0_3 = arith.constant 0 : index
    %c0_4 = arith.constant 0 : index
    %c0_5 = arith.constant 0 : index
    %6 = vector.load %arg3[%c0_3, %c0_4, %c0_5] : memref<1x4x4xf32, #tpu.memory_space<vmem>>, vector<1x4x4xf32>
    %7 = vector.shape_cast %6 : vector<1x4x4xf32> to vector<4x4xf32>
    %cst_6 = arith.constant dense<0.000000e+00> : vector<4x4xf32>
    %8 = tpu.matmul %4, %4, %cst_6 {dimension_numbers = #tpu.dot_dimension_numbers<[1], [1], [0], [0], [0, 0, 1, 0], [], []>} : vector<4x64xf32>, vector<4x64xf32>, vector<4x4xf32> -> vector<4x4xf32>
    %9 = arith.addf %7, %8 : vector<4x4xf32>
    %c0_7 = arith.constant 0 : index
    %c0_8 = arith.constant 0 : index
    %c0_9 = arith.constant 0 : index
    %10 = vector.load %arg3[%c0_7, %c0_8, %c0_9] : memref<1x4x4xf32, #tpu.memory_space<vmem>>, vector<1x4x4xf32>
    %11 = vector.shape_cast %10 : vector<1x4x4xf32> to vector<4x4xf32>
    %12 = vector.shape_cast %9 : vector<4x4xf32> to vector<1x4x4xf32>
    tpu.vector_store %arg3[%c0_7, %c0_8, %c0_9], %12 {strides = array<i32>} : memref<1x4x4xf32, #tpu.memory_space<vmem>>, vector<1x4x4xf32>,
    %c0_10 = arith.constant 0 : index
    %c0_11 = arith.constant 0 : index
    %c0_12 = arith.constant 0 : index
    %13 = vector.load %arg4[%c0_10, %c0_11, %c0_12] : memref<1x4x1xf32, #tpu.memory_space<vmem>>, vector<1x4x1xf32>
    %14 = vector.shape_cast %13 : vector<1x4x1xf32> to vector<4x1xf32>
    %cst_13 = arith.constant dense<0.000000e+00> : vector<4x1xf32>
    %15 = tpu.matmul %4, %5, %cst_13 {dimension_numbers = #tpu.dot_dimension_numbers<[1], [1], [0], [0], [0, 0, 1, 0], [], []>} : vector<4x64xf32>, vector<1x64xf32>, vector<4x1xf32> -> vector<4x1xf32>
    %16 = arith.addf %14, %15 : vector<4x1xf32>
    %c0_14 = arith.constant 0 : index
    %c0_15 = arith.constant 0 : index
    %c0_16 = arith.constant 0 : index
    %17 = vector.load %arg4[%c0_14, %c0_15, %c0_16] : memref<1x4x1xf32, #tpu.memory_space<vmem>>, vector<1x4x1xf32>
    %18 = vector.shape_cast %17 : vector<1x4x1xf32> to vector<4x1xf32>
    %19 = vector.shape_cast %16 : vector<4x1xf32> to vector<1x4x1xf32>
    tpu.vector_store %arg4[%c0_14, %c0_15, %c0_16], %19 {strides = array<i32>} : memref<1x4x1xf32, #tpu.memory_space<vmem>>, vector<1x4x1xf32>,
    return
  }
  func.func @transform_0(%arg0: i32, %arg1: i32) -> (i32, i32, i32) {
    %c0_i32 = arith.constant 0 : i32
    %c0_i32_0 = arith.constant 0 : i32
    return %arg0, %c0_i32, %arg1 : i32, i32, i32
  }
  func.func @transform_1(%arg0: i32, %arg1: i32) -> (i32, i32, i32) {
    %c0_i32 = arith.constant 0 : i32
    %c0_i32_0 = arith.constant 0 : i32
    %c0_i32_1 = arith.constant 0 : i32
    return %arg0, %c0_i32, %c0_i32_0 : i32, i32, i32
  }
  func.func @transform_2(%arg0: i32, %arg1: i32) -> (i32, i32, i32) {
    %c0_i32 = arith.constant 0 : i32
    %c0_i32_0 = arith.constant 0 : i32
    %c0_i32_1 = arith.constant 0 : i32
    return %arg0, %c0_i32, %c0_i32_0 : i32, i32, i32
  }
}

</mosaic_0001>

<llo_original>
// kernel: tpu_custom_call.1
$region0: #{tpu_custom_call.1}
  #allocation0 [shape = 'u32[]', space=smem, size = 0x4, offset = 0x4, fixed_abs, tag = 'smem constant byte address 0x4 - core index']
  #allocation1 [shape = 'u32[144,128]{1,0:T(1,128)}', space=vmem, size = 0x12000, scoped, tag = 'internal scratch']
  %s0 = inlined_call_operand.hbm [shape: f32[2,4,64], index: 0, kind: input, shape index: {}]
  %s1 = inlined_call_operand.hbm [shape: f32[2,4,4], index: 1, kind: output, shape index: {0}]
  %s2 = inlined_call_operand.vmem [shape: f32[2,4,1], index: 2, kind: output, shape index: {1}]
  %3 = xla_tuple %s1, %s2
  %s4 = sld [smem:[#allocation0]]
  $region53: #{tpu_custom_call.1} parent=0
    _
  %s6 = ssub.s32 1, %s4
  %s7 = scalar_select 0, %s6, %s4
  $region1: #{tpu_custom_call.1} parent=0
    #allocation2 [shape = 'u8[4096]{0}', space=vmem, size = 0x1000, scoped, tag = 'input window, operand 0']
    #allocation3 [shape = 's32[2]{0}', space=sflag, size = 0x8, scoped, tag = 'scoped memory for tpu_custom_call.1']
    #allocation4 [shape = 's32[2]{0}', space=sflag, size = 0x8, scoped, tag = 'scoped memory for tpu_custom_call.1']
    #allocation5 [shape = 'u8[4096]{0}', space=vmem, size = 0x1000, scoped, tag = 'output window, operand 0']
    %8 = vsyncpa [#allocation3], 0
    %s9 = scalar_lea.sflag [#allocation3], 1
    %10 = vsyncpa %s9, 0
    %11 = vsyncpa [#allocation4], 0
    %s12 = scalar_lea.sflag [#allocation4], 1
    %13 = vsyncpa %s12, 0
    loop: start=0, step=1, limit=4
    $region2: #{tpu_custom_call.1} parent=1 // loop_pre_header
      _
    $region3: #{tpu_custom_call.1} parent=1 // loop_header
      %s15 = sphi 0, %s19
      %p16 = scmp.ge.s32.totalorder %s15, 4
      %s22 = sphi 0, %s34
      %s23 = sphi 0, %s30
      %s24 = sphi 0, %s22
      %s25 = sphi 0, %s23
      %s26 = sphi 0, %s24
      %s27 = sphi 0, %s25
      %s39 = sphi 0, %s41
      %s42 = sphi 0, %s39
      %s43 = sphi 0, %s42
      %s59 = sphi 0, %s43
      %s65 = sphi 0, %s67
      %s68 = sphi 0, %s65
      %s69 = sphi 0, %s68
      %s85 = sphi 0, %s69
      %s91 = sphi 0, %s93
      %s94 = sphi 0, %s91
      %s95 = sphi 0, %s94
      %s111 = sphi 0, %s95
    $region4: #{tpu_custom_call.1} parent=1 // loop_header_branch
      %18 = sbr.rel (%p16) target = $region8
    $region5: #{tpu_custom_call.1} parent=1 // loop_body
      %s20 = ssub.s32 %s15, 1
      %s21 = ssub.s32 %s15, 2
      %s28 = sadd.s32 1, %s23
      %p29 = scmp.ge.s32.totalorder %s28, 1
      %s30 = scalar_select %p29, 0, %s28
      %s31 = sadd.s32 1, %s22
      %s32 = scalar_select %p29, %s31, %s22
      %p33 = scmp.ge.s32.totalorder %s32, 2
      %s34 = scalar_select %p33, 0, %s32
      %s35 = ssub.s32 %s22, %s34
      %s36 = ssub.s32 %s23, %s30
      %s37 = sor.u32 %s35, %s36
      %p38 = scmp.eq.s32.totalorder %s37, 0
      %s40 = sadd.s32 %s39, 1
      %s41 = scalar_select %p38, %s39, %s40
      %p44 = pneg %p38
      %p45 = scmp.eq.s32.totalorder %s15, 1
      %p46 = por %p44, %p45
      %p47 = scmp.ne.s32.totalorder %s39, %s42
      %p48 = scmp.eq.s32.totalorder %s15, 0
      %p49 = por %p47, %p48
      %p50 = scmp.ne.s32.totalorder %s39, %s42
      %p51 = scmp.eq.s32.totalorder %s20, 1
      %p52 = por %p50, %p51
      %p53 = scmp.ne.s32.totalorder %s42, %s43
      %p54 = scmp.eq.s32.totalorder %s20, 0
      %p55 = por %p53, %p54
      %p56 = scmp.ne.s32.totalorder %s42, %s43
      %p57 = scmp.eq.s32.totalorder %s21, 1
      %p58 = por %p56, %p57
      %p60 = scmp.ne.s32.totalorder %s43, %s59
      %p61 = scmp.eq.s32.totalorder %s21, 0
      %p62 = por %p60, %p61
      %s63 = ssub.s32 %s22, %s34
      %p64 = scmp.eq.s32.totalorder %s63, 0
      %s66 = sadd.s32 %s65, 1
      %s67 = scalar_select %p64, %s65, %s66
      %p70 = pneg %p64
      %p71 = scmp.eq.s32.totalorder %s15, 1
      %p72 = por %p70, %p71
      %p73 = scmp.ne.s32.totalorder %s65, %s68
      %p74 = scmp.eq.s32.totalorder %s15, 0
      %p75 = por %p73, %p74
      %p76 = scmp.ne.s32.totalorder %s65, %s68
      %p77 = scmp.eq.s32.totalorder %s20, 1
      %p78 = por %p76, %p77
      %p79 = scmp.ne.s32.totalorder %s68, %s69
      %p80 = scmp.eq.s32.totalorder %s20, 0
      %p81 = por %p79, %p80
      %p82 = scmp.ne.s32.totalorder %s68, %s69
      %p83 = scmp.eq.s32.totalorder %s21, 1
      %p84 = por %p82, %p83
      %p86 = scmp.ne.s32.totalorder %s69, %s85
      %p87 = scmp.eq.s32.totalorder %s21, 0
      %p88 = por %p86, %p87
      %s89 = ssub.s32 %s22, %s34
      %p90 = scmp.eq.s32.totalorder %s89, 0
      %s92 = sadd.s32 %s91, 1
      %s93 = scalar_select %p90, %s91, %s92
      %p96 = pneg %p90
      %p97 = scmp.eq.s32.totalorder %s15, 1
      %p98 = por %p96, %p97
      %p99 = scmp.ne.s32.totalorder %s91, %s94
      %p100 = scmp.eq.s32.totalorder %s15, 0
      %p101 = por %p99, %p100
      %p102 = scmp.ne.s32.totalorder %s91, %s94
      %p103 = scmp.eq.s32.totalorder %s20, 1
      %p104 = por %p102, %p103
      %p105 = scmp.ne.s32.totalorder %s94, %s95
      %p106 = scmp.eq.s32.totalorder %s20, 0
      %p107 = por %p105, %p106
      %p108 = scmp.ne.s32.totalorder %s94, %s95
      %p109 = scmp.eq.s32.totalorder %s21, 1
      %p110 = por %p108, %p109
      %p112 = scmp.ne.s32.totalorder %s95, %s111
      %p113 = scmp.eq.s32.totalorder %s21, 0
      %p114 = por %p112, %p113
      %p115 = scmp.le.s32.totalorder 1, %s15
      %p116 = scmp.lt.s32.totalorder %s15, 3
      %p117 = pnand %p115, %p116
      %p118 = pneg %p117
      // Predicated region
      $region9: #{tpu_custom_call.1} parent=5 // pred_check
        _
      $region10: #{tpu_custom_call.1} parent=5 // pred_check_branch
        %120 = sbr.rel (%p117) target = $region12
      $region11: #{tpu_custom_call.1} parent=5 // pred_region
        %s121 = ssub.s32 %s15, 1
      $region12: #{tpu_custom_call.1} parent=5 // pred_fallthru
        _
      %p122 = scmp.lt.s32.totalorder %s15, 2
      // Predicated region
      $region13: #{tpu_custom_call.1} parent=5 // pred_check
        %p123 = pneg %p122
      $region14: #{tpu_custom_call.1} parent=5 // pred_check_branch
        %125 = sbr.rel (%p123) target = $region16
      $region15: #{tpu_custom_call.1} parent=5 // pred_region
        // Predicated region
        $region17: #{tpu_custom_call.1} parent=15 // pred_check
          %p126 = pneg %p49
        $region18: #{tpu_custom_call.1} parent=15 // pred_check_branch
          %128 = sbr.rel (%p126) target = $region20
        $region19: #{tpu_custom_call.1} parent=15 // pred_region
          %s129 = sand.u32 %s39, 1
          %s130 = scalar_lea.sflag [#allocation3], %s129
          %s131 = sand.u32 %s39, 1
          %s132 = smul.addr %s131, 4
          %s133 = scalar_lea.vmem [#allocation2], %s132
          %s135 = ssub.s32 64, 64
          %136 = vsyncadd %s130, %s135
          %s137 = sadd.s32 %s23, %s22
          %s138 = smul.addr %s137, 64
          %s139 = scalar_lea.hbm %s0, %s138
          %s141 = sshll.u32 %s133, 4
          %s142 = int_to_ptr.vmem [resolvable:$true] %s141
          %144 = dma.hbm_to_vmem [thread:$0]  %s139, 64, %s142, %s130
        $region20: #{tpu_custom_call.1} parent=15 // pred_fallthru
          _
      $region16: #{tpu_custom_call.1} parent=5 // pred_fallthru
        _
      %p145 = scmp.le.s32.totalorder 1, %s15
      %p146 = scmp.lt.s32.totalorder %s15, 3
      %p147 = pnand %p145, %p146
      %p148 = pneg %p147
      // Predicated region
      $region21: #{tpu_custom_call.1} parent=5 // pred_check
        _
      $region22: #{tpu_custom_call.1} parent=5 // pred_check_branch
        %150 = sbr.rel (%p147) target = $region24
      $region23: #{tpu_custom_call.1} parent=5 // pred_region
        %s151 = ssub.s32 %s15, 1
        %s152 = sand.u32 %s42, 1
        %s153 = scalar_lea.sflag [#allocation3], %s152
        %s154 = sand.u32 %s42, 1
        %s155 = smul.addr %s154, 4
        %s156 = scalar_lea.vmem [#allocation2], %s155
        // Predicated region
        $region25: #{tpu_custom_call.1} parent=23 // pred_check
          %p157 = pneg %p55
        $region26: #{tpu_custom_call.1} parent=23 // pred_check_branch
          %159 = sbr.rel (%p157) target = $region28
        $region27: #{tpu_custom_call.1} parent=23 // pred_region
          %160 = dma.done %s153, 64
        $region28: #{tpu_custom_call.1} parent=23 // pred_fallthru
          _
        %s161 = sand.u32 %s42, 1
        %s162 = scalar_lea.sflag [#allocation3], %s161
        %s163 = sand.u32 %s42, 1
        %s164 = smul.addr %s163, 4
        %s165 = scalar_lea.vmem [#allocation2], %s164
        %p166 = pneg %p55
        %p167 = pneg %p52
        %p168 = pneg %p81
        %p169 = pneg %p78
        %s170 = sand.u32 %s68, 1
        %s171 = scalar_lea.sflag [#allocation4], %s170
        %s172 = sand.u32 %s68, 1
        %s173 = smul.addr %s172, 4
        %s174 = scalar_lea.vmem [#allocation5], %s173
        %p175 = pneg %p107
        %p176 = pneg %p104
        %p177 = scmp.lt.s32.totalorder %s24, 1
        %s178 = scalar_select %p177, %s24, 1
        %s179 = smul.addr %s178, 4
        %s180 = scalar_lea.vmem %s2, %s179
        %p181 = scmp.lt.s32.totalorder %s24, 1
        %s182 = scalar_select %p181, %s24, 1
        %s183 = smul.addr %s182, 4
        %s184 = scalar_lea.vmem %s2, %s183
        %p185 = scmp.eq.s32.totalorder %s25, 0
        // Predicated region
        $region29: #{tpu_custom_call.1} parent=23 // pred_check
          %p186 = pneg %p185
        $region30: #{tpu_custom_call.1} parent=23 // pred_check_branch
          %188 = sbr.rel (%p186) target = $region32
        $region31: #{tpu_custom_call.1} parent=23 // pred_region
          %vm189 = vcmask 27648
          %190 = vst.msk [vmem:[%s174] sm:$0xf] %vm189, 0.0
          %vm191 = vcmask 3072
          %192 = vst.msk [vmem:[%s184] sm:$0xf] %vm191, 0.0
        $region32: #{tpu_custom_call.1} parent=23 // pred_fallthru
          _
        %v193 = vld [vmem:[%s156] sm:$0xf]
        %v194 = vld [vmem:[%s174] sm:$0xf]
        %vm195 = vcmask 523264
        %v197 = vsel %vm195, %v193, 0
        %199 = vmatprep.subr.mxu0 0.0
        %200 = vmatpush1.xpose.msra.mxu0 0.0
        %201 = vmatprep.subr.mxu0 0.0
        %202 = vmatpush1.xpose.msra.mxu0 0.0
        %203 = vmatprep.subr.mxu0 0.0
        %204 = vmatpush1.xpose.msra.mxu0 0.0
        %205 = vmatprep.subr.mxu0 0.0
        %206 = vmatpush1.xpose.msra.mxu0 0.0
        %207 = vmatprep.subr.mxu0 0.0
        %208 = vmatpush1.xpose.msra.mxu0 0.0
        %209 = vmatprep.subr.mxu0 0.0
        %210 = vmatpush1.xpose.msra.mxu0 0.0
        %211 = vmatprep.subr.mxu0 0.0
        %212 = vmatpush1.xpose.msra.mxu0 0.0
        %213 = vmatprep.subr.mxu0 0.0
        %214 = vmatpush1.xpose.msra.mxu0 0.0
        %215 = vmatprep.subr.mxu0 0.0
        %216 = vmatpush1.xpose.msra.mxu0 0.0
        %217 = vmatprep.subr.mxu0 0.0
        %218 = vmatpush1.xpose.msra.mxu0 0.0
        %219 = vmatprep.subr.mxu0 0.0
        %220 = vmatpush1.xpose.msra.mxu0 0.0
        %221 = vmatprep.subr.mxu0 0.0
        %222 = vmatpush1.xpose.msra.mxu0 0.0
        %223 = vmatprep.subr.mxu0 0.0
        %224 = vmatpush1.xpose.msra.mxu0 0.0
        %225 = vmatprep.subr.mxu0 0.0
        %226 = vmatpush1.xpose.msra.mxu0 0.0
        %227 = vmatprep.subr.mxu0 0.0
        %228 = vmatpush1.xpose.msra.mxu0 0.0
        %229 = vmatprep.subr.mxu0 0.0
        %230 = vmatpush1.xpose.msra.mxu0 %v197
        %231 = vmatprep.subr.mxu0 0.0
        %232 = vmatpush2.xpose.msra.mxu0 0.0
        %233 = vmatprep.subr.mxu0 0.0
        %234 = vmatpush2.xpose.msra.mxu0 0.0
        %235 = vmatprep.subr.mxu0 0.0
        %236 = vmatpush2.xpose.msra.mxu0 0.0
        %237 = vmatprep.subr.mxu0 0.0
        %238 = vmatpush2.xpose.msra.mxu0 0.0
        %239 = vmatprep.subr.mxu0 0.0
        %240 = vmatpush2.xpose.msra.mxu0 0.0
        %241 = vmatprep.subr.mxu0 0.0
        %242 = vmatpush2.xpose.msra.mxu0 0.0
        %243 = vmatprep.subr.mxu0 0.0
        %244 = vmatpush2.xpose.msra.mxu0 0.0
        %245 = vmatprep.subr.mxu0 0.0
        %246 = vmatpush2.xpose.msra.mxu0 0.0
        %247 = vmatprep.subr.mxu0 0.0
        %248 = vmatpush2.xpose.msra.mxu0 0.0
        %249 = vmatprep.subr.mxu0 0.0
        %250 = vmatpush2.xpose.msra.mxu0 0.0
        %251 = vmatprep.subr.mxu0 0.0
        %252 = vmatpush2.xpose.msra.mxu0 0.0
        %253 = vmatprep.subr.mxu0 0.0
        %254 = vmatpush2.xpose.msra.mxu0 0.0
        %255 = vmatprep.subr.mxu0 0.0
        %256 = vmatpush2.xpose.msra.mxu0 0.0
        %257 = vmatprep.subr.mxu0 0.0
        %258 = vmatpush2.xpose.msra.mxu0 0.0
        %259 = vmatprep.subr.mxu0 0.0
        %260 = vmatpush2.xpose.msra.mxu0 0.0
        %261 = vmatprep.subr.mxu0 0.0
        %262 = vmatpush2.xpose.msra.mxu0 0.0
        %263 = vmatprep.mubr.f32.mxu0 0.0
        %264 = vmatmul.mubr.f32.gmra.mxu0 %v197
        %v265 = vpop.f32.mrf.mxu0
        %v266 = vadd.f32 0.0, %v265
        %v267 = vpop.f32.mrf.mxu0
        %268 = vdwg.mxu0
        %v269 = vadd.f32 %v194, %v266
        %vm270 = vcmask 27648
        %271 = vst.msk [vmem:[%s174] sm:$0xf] %vm270, %v269
        %v272 = vld [vmem:[%s184] sm:$0xf]
        %vm273 = vcmask 519168
        %v274 = vsel %vm273, %v193, 0.0
        %275 = vadd.xlane.f32.xlu0 %v274
        %v276 = vpop.xlane.xlu0 %275
        %v277 = vadd.f32 %v272, %v276
        %vm278 = vcmask 3072
        %279 = vst.msk [vmem:[%s184] sm:$0xf] %vm278, %v277
        %s280 = sand.u32 %s68, 1
        %s281 = scalar_lea.sflag [#allocation4], %s280
        %s282 = sand.u32 %s68, 1
        %s283 = smul.addr %s282, 4
        %s284 = scalar_lea.vmem [#allocation5], %s283
        %p285 = scmp.lt.s32.totalorder %s24, 1
        %s286 = scalar_select %p285, %s24, 1
        %s287 = smul.addr %s286, 4
        %s288 = scalar_lea.vmem %s2, %s287
        // Predicated region
        $region33: #{tpu_custom_call.1} parent=23 // pred_check
          %p289 = pneg %p78
        $region34: #{tpu_custom_call.1} parent=23 // pred_check_branch
          %291 = sbr.rel (%p289) target = $region36
        $region35: #{tpu_custom_call.1} parent=23 // pred_region
          %s293 = ssub.s32 64, 64
          %294 = vsyncadd %s281, %s293
          %s295 = smul.addr %s24, 64
          %s296 = scalar_lea.hbm %s1, %s295
          %s298 = sshll.u32 %s284, 4
          %s299 = int_to_ptr.vmem [resolvable:$true] %s298
          %301 = dma.vmem_to_hbm [thread:$0]  %s299, 64, %s296, %s281
        $region36: #{tpu_custom_call.1} parent=23 // pred_fallthru
          _
        // Predicated region
        $region37: #{tpu_custom_call.1} parent=23 // pred_check
          %p302 = pneg %p104
        $region38: #{tpu_custom_call.1} parent=23 // pred_check_branch
          %304 = sbr.rel (%p302) target = $region40
        $region39: #{tpu_custom_call.1} parent=23 // pred_region
          _
        $region40: #{tpu_custom_call.1} parent=23 // pred_fallthru
          _
      $region24: #{tpu_custom_call.1} parent=5 // pred_fallthru
        _
      %p305 = scmp.le.s32.totalorder 2, %s15
      // Predicated region
      $region41: #{tpu_custom_call.1} parent=5 // pred_check
        %p306 = pneg %p305
      $region42: #{tpu_custom_call.1} parent=5 // pred_check_branch
        %308 = sbr.rel (%p306) target = $region44
      $region43: #{tpu_custom_call.1} parent=5 // pred_region
        %s309 = ssub.s32 %s15, 2
        // Predicated region
        $region45: #{tpu_custom_call.1} parent=43 // pred_check
          %p310 = pneg %p84
        $region46: #{tpu_custom_call.1} parent=43 // pred_check_branch
          %312 = sbr.rel (%p310) target = $region48
        $region47: #{tpu_custom_call.1} parent=43 // pred_region
          %s313 = sand.u32 %s69, 1
          %s314 = scalar_lea.sflag [#allocation4], %s313
          %s315 = sand.u32 %s69, 1
          %s316 = smul.addr %s315, 4
          %s317 = scalar_lea.vmem [#allocation5], %s316
          %318 = dma.done %s314, 64
        $region48: #{tpu_custom_call.1} parent=43 // pred_fallthru
          _
        // Predicated region
        $region49: #{tpu_custom_call.1} parent=43 // pred_check
          %p319 = pneg %p110
        $region50: #{tpu_custom_call.1} parent=43 // pred_check_branch
          %321 = sbr.rel (%p319) target = $region52
        $region51: #{tpu_custom_call.1} parent=43 // pred_region
          %p322 = scmp.lt.s32.totalorder %s26, 1
          %s323 = scalar_select %p322, %s26, 1
          %s324 = smul.addr %s323, 4
          %s325 = scalar_lea.vmem %s2, %s324
        $region52: #{tpu_custom_call.1} parent=43 // pred_fallthru
          _
      $region44: #{tpu_custom_call.1} parent=5 // pred_fallthru
        _
    $region6: #{tpu_custom_call.1} parent=1 // loop_footer
      %s19 = sadd.s32 1, %s15
    $region7: #{tpu_custom_call.1} parent=1 // loop_footer_branch
      %14 = sbr.rel target = $region3
    $region8: #{tpu_custom_call.1} parent=1 // loop_exit
      _
    %326 = vsyncpa [#allocation3], 1
    %s327 = scalar_lea.sflag [#allocation3], 1
    %328 = vsyncpa %s327, 1
    %329 = vsyncpa [#allocation4], 1
    %s330 = scalar_lea.sflag [#allocation4], 1
    %331 = vsyncpa %s330, 1

</llo_original>
